<compile_context>
chip_gen: v6e
topology: v6e:2x2x1
jax: 0.10.0
libtpu: 0.0.40
codegen_flags: <defaults>
</compile_context>

<pallas_src>
import jax
import jax.numpy as jnp
import numpy as np
from jax.experimental import pallas as pl
from jax.experimental.pallas import tpu as pltpu

CODES = {'A': 0, 'T': 3, 'G': 1, 'C': 2, 'N': 4}


def n2id(n: str) -> int:
    return CODES[n.upper()]


# Vectorized host-side ASCII -> id lookup (no per-character Python loop on hot path).
_ASCII_LUT = np.full(256, 255, dtype=np.uint8)
for _ch, _v in CODES.items():
    _ASCII_LUT[ord(_ch)] = _v
    _ASCII_LUT[ord(_ch.lower())] = _v


def seq_to_ids(seq: str) -> np.ndarray:
    raw = np.frombuffer(seq.encode("ascii"), dtype=np.uint8)
    ids = _ASCII_LUT[raw]
    if (ids == 255).any():
        raise ValueError("sequence contains characters outside {A,C,G,T,N}")
    return ids


MAX_TILE_L = 131072            # max lanes per block (long single-sequence case)
TARGET_LANES_PER_STEP = 131072  # bb*TL budget: ~2 MiB useful f32 out per grid step


def _round_up(x: int, m: int) -> int:
    return (x + m - 1) // m * m


def _seq2tensor_kernel(ids_ref, out_ref):
    # ids_ref: (bb, 1, TL) uint8 in VMEM; out_ref: (bb, 4, TL) out_dtype in VMEM
    ids = ids_ref[...].astype(jnp.int32)                           # (bb, 1, TL)
    bb, _, tl = ids.shape
    chan = jax.lax.broadcasted_iota(jnp.int32, (bb, 4, tl), 1)     # channel per sublane
    onehot = (chan == ids).astype(jnp.float32)                     # implicit bcast -> (bb,4,TL)
    # N (id == 4): whole column becomes 0.25 (chan != id there, so fused select is exact)
    out_ref[...] = jnp.where(ids == 4, jnp.float32(0.25), onehot).astype(out_ref.dtype)


def seq2tensor_ids(ids: jax.Array, *, out_dtype=jnp.float32,
                   max_tile_l: int = MAX_TILE_L) -> jax.Array:
    """ids: (L,) or (B, L) integer array with values in [0, 5).

    Values > 4 silently produce all-zero columns (only the string path validates).
    Returns (4, L) or (B, 4, L) in `out_dtype` (default float32, matching PyTorch;
    bfloat16 is exact for {0, 1, 0.25} and halves the dominant HBM write traffic)."""
    squeeze = ids.ndim == 1
    if squeeze:
        ids = ids[None, :]
    B, L = ids.shape

    # Lane tile: multiple of 128, capped.  Batch tile bb: enough rows that each grid
    # step moves ~TARGET_LANES_PER_STEP output lanes; keep bb even so bb*4 output rows
    # fill whole 8-sublane f32 tiles (unmasked stores) whenever B allows it.
    TL = min(max_tile_l, _round_up(L, 128))
    bb = max(1, TARGET_LANES_PER_STEP // TL)
    bb = min(bb, B)
    if bb >= 2:
        bb -= bb % 2

    ids_u8 = ids.astype(jnp.uint8).reshape(B, 1, L)  # keep last-two dims (1, TL)-legal

    out_bytes = B * 4 * L * jnp.dtype(out_dtype).itemsize
    grid = (pl.cdiv(B, bb), pl.cdiv(L, TL))

    out = pl.pallas_call(
        _seq2tensor_kernel,
        out_shape=jax.ShapeDtypeStruct((B, 4, L), out_dtype),
        grid=grid,
        in_specs=[pl.BlockSpec((bb, 1, TL), lambda b, i: (b, 0, i))],
        out_specs=pl.BlockSpec((bb, 4, TL), lambda b, i: (b, 0, i)),
        compiler_params=pltpu.CompilerParams(
            dimension_semantics=("parallel", "parallel"),
            vmem_limit_bytes=32 * 1024 * 1024),
        cost_estimate=pl.CostEstimate(
            flops=2 * B * 4 * L, transcendentals=0,
            bytes_accessed=B * L + out_bytes),
    )(ids_u8)

    if squeeze:
        out = jnp.squeeze(out, axis=0)
    return out


def seq2tensor(seq: str) -> jax.Array:
    """Full PyTorch-equivalent entry point: string -> (4, L) float32."""
    ids = jnp.asarray(seq_to_ids(seq))
    return seq2tensor_ids(ids)


def _numpy_reference(ids_np: np.ndarray) -> np.ndarray:
    # Mirrors the PyTorch forward for arbitrary leading batch dims.
    code = np.eye(5, dtype=np.float32)[ids_np]       # one_hot, 5 classes
    code[code[..., 4] == 1] = 0.25                   # N rows -> 0.25
    code = code[..., :4]                             # drop N column
    return np.swapaxes(code, -1, -2)                 # (..., 4, L)


if __name__ == "__main__":
    # 1) Single-sequence path through the string entry point (matches the nn.Module).
    key = jax.random.PRNGKey(0)
    L = 16
    ids = jax.random.randint(key, (L,), 0, 5, dtype=jnp.int32)
    alphabet = "AGCTN"  # index -> letter consistent with CODES
    seq = "".join(alphabet[int(i)] for i in ids)

    out = jax.block_until_ready(seq2tensor(seq))
    ref = _numpy_reference(np.array([n2id(c) for c in seq]))
    np.testing.assert_allclose(np.asarray(out), ref, rtol=0, atol=0)
    assert out.shape == (4, L) and out.dtype == jnp.float32

    # 2) Batched path, L not a multiple of 128 (partial lane block, no pad/slice).
    ids_b = jax.random.randint(jax.random.PRNGKey(0), (2, 300), 0, 5, dtype=jnp.int32)
    out_b = jax.block_until_ready(seq2tensor_ids(ids_b))
    ref_b = _numpy_reference(np.asarray(ids_b))
    np.testing.assert_allclose(np.asarray(out_b), ref_b, rtol=0, atol=0)
    assert out_b.shape == (2, 4, 300) and out_b.dtype == jnp.float32

    # 2b) bf16 output variant (0/1/0.25 exact).
    out_bf = jax.block_until_ready(seq2tensor_ids(ids_b, out_dtype=jnp.bfloat16))
    np.testing.assert_allclose(np.asarray(out_bf.astype(jnp.float32)), ref_b,
                               rtol=0, atol=0)

    # 3) Stress the partial-block paths at small shapes: odd B (partial batch block)
    #    and forced small lane tile (multiple L blocks with a partial last one).
    ids_c = jax.random.randint(jax.random.PRNGKey(0), (3, 300), 0, 5, dtype=jnp.int32)
    out_c = jax.block_until_ready(seq2tensor_ids(ids_c, max_tile_l=128))
    ref_c = _numpy_reference(np.asarray(ids_c))
    np.testing.assert_allclose(np.asarray(out_c), ref_c, rtol=0, atol=0)
    assert out_c.shape == (3, 4, 300) and out_c.dtype == jnp.float32

    print("KERNEL_OK")
</pallas_src>

<mosaic_0001>
module attributes {stable_mosaic.version = 11 : i64} {
  func.func @_seq2tensor_kernel(%arg0: i32, %arg1: i32, %arg2: memref<1x1x128xi8, #tpu.memory_space<vmem>>, %arg3: memref<1x4x128xf32, #tpu.memory_space<vmem>>) attributes {dimension_semantics = [#tpu.dimension_semantics<parallel>, #tpu.dimension_semantics<parallel>], iteration_bounds = array<i64: 1, 1>, scalar_prefetch = 0 : i64, scratch_operands = 0 : i64, tpu.core_type = #tpu.core_type<tc>, window_params = [{transform_indices = @transform_0, window_bounds = array<i64: 1, 1, 128>}, {transform_indices = @transform_1, window_bounds = array<i64: 1, 4, 128>}]} {
    %c0 = arith.constant 0 : index
    %c0_0 = arith.constant 0 : index
    %c0_1 = arith.constant 0 : index
    %0 = vector.load %arg2[%c0, %c0_0, %c0_1] : memref<1x1x128xi8, #tpu.memory_space<vmem>>, vector<1x1x128xi8>
    %1 = arith.extui %0 : vector<1x1x128xi8> to vector<1x1x128xi32>
    %2 = tpu.iota {dimensions = array<i32: 1>} : vector<1x4x128xi32>
    %3 = vector.broadcast %1 : vector<1x1x128xi32> to vector<1x4x128xi32>
    %4 = arith.cmpi eq, %2, %3 : vector<1x4x128xi32>
    %5 = arith.extui %4 : vector<1x4x128xi1> to vector<1x4x128xi32>
    %6 = arith.sitofp %5 : vector<1x4x128xi32> to vector<1x4x128xf32>
    %c4_i32 = arith.constant 4 : i32
    %7 = vector.broadcast %c4_i32 : i32 to vector<1x1x128xi32>
    %8 = arith.cmpi eq, %1, %7 : vector<1x1x128xi32>
    %cst = arith.constant 2.500000e-01 : f32
    %9 = vector.shape_cast %8 : vector<1x1x128xi1> to vector<1x1x128xi1>
    %10 = vector.broadcast %9 : vector<1x1x128xi1> to vector<1x4x128xi1>
    %11 = vector.broadcast %cst : f32 to vector<1x4x128xf32>
    %12 = arith.select %10, %11, %6 : vector<1x4x128xi1>, vector<1x4x128xf32>
    %c0_2 = arith.constant 0 : index
    %c0_3 = arith.constant 0 : index
    %c0_4 = arith.constant 0 : index
    %13 = vector.load %arg3[%c0_2, %c0_3, %c0_4] : memref<1x4x128xf32, #tpu.memory_space<vmem>>, vector<1x4x128xf32>
    tpu.vector_store %arg3[%c0_2, %c0_3, %c0_4], %12 {strides = array<i32>} : memref<1x4x128xf32, #tpu.memory_space<vmem>>, vector<1x4x128xf32>,
    return
  }
  func.func @transform_0(%arg0: i32, %arg1: i32) -> (i32, i32, i32) {
    %c0_i32 = arith.constant 0 : i32
    %c0_i32_0 = arith.constant 0 : i32
    return %arg0, %c0_i32, %arg1 : i32, i32, i32
  }
  func.func @transform_1(%arg0: i32, %arg1: i32) -> (i32, i32, i32) {
    %c0_i32 = arith.constant 0 : i32
    %c0_i32_0 = arith.constant 0 : i32
    return %arg0, %c0_i32, %arg1 : i32, i32, i32
  }
}

</mosaic_0001>

<llo_original>
// kernel: tpu_custom_call.1
$region0: #{tpu_custom_call.1}
  #allocation0 [shape = 'u32[]', space=smem, size = 0x4, offset = 0x4, fixed_abs, tag = 'smem constant byte address 0x4 - core index']
  #allocation1 [shape = 'u32[144,128]{1,0:T(1,128)}', space=vmem, size = 0x12000, scoped, tag = 'internal scratch']
  %s0 = inlined_call_operand.hbm [shape: u8[1,1,16], index: 0, kind: input, shape index: {}]
  %s1 = inlined_call_operand.hbm [shape: f32[1,4,16], index: 1, kind: output, shape index: {}]
  %s2 = sld [smem:[#allocation0]]
  $region18: #{tpu_custom_call.1} parent=0
    _
  %s4 = ssub.s32 1, %s2
  %s5 = scalar_select 0, %s4, %s2
  $region1: #{tpu_custom_call.1} parent=0
    #allocation2 [shape = 'u8[512]{0}', space=vmem, size = 0x400, scoped, tag = 'input window, operand 0, single buffered']
    #allocation3 [shape = 's32[1]{0}', space=sflag, size = 0x4, scoped, tag = 'scoped memory for tpu_custom_call.1']
    #allocation4 [shape = 's32[1]{0}', space=sflag, size = 0x4, scoped, tag = 'scoped memory for tpu_custom_call.1']
    #allocation5 [shape = 'u8[2048]{0}', space=vmem, size = 0x800, scoped, tag = 'output window, operand 0, single buffered']
    %6 = vsyncpa [#allocation3], 0
    %7 = vsyncpa [#allocation4], 0
    // Predicated region
    $region2: #{tpu_custom_call.1} parent=1 // pred_check
      _
    $region3: #{tpu_custom_call.1} parent=1 // pred_check_branch
      %9 = sbr.rel (0) target = $region5
    $region4: #{tpu_custom_call.1} parent=1 // pred_region
      %s11 = ssub.s32 16, 16
      %12 = vsyncadd [#allocation3], %s11
      %s14 = sshll.u32 [#allocation2], 4
      %s15 = int_to_ptr.vmem [resolvable:$true] %s14
      %17 = dma.hbm_to_vmem [thread:$0]  %s0, 16, %s15, [#allocation3]
    $region5: #{tpu_custom_call.1} parent=1 // pred_fallthru
      _
    // Predicated region
    $region6: #{tpu_custom_call.1} parent=1 // pred_check
      _
    $region7: #{tpu_custom_call.1} parent=1 // pred_check_branch
      %19 = sbr.rel (0) target = $region9
    $region8: #{tpu_custom_call.1} parent=1 // pred_region
      %20 = dma.done [#allocation3], 16
    $region9: #{tpu_custom_call.1} parent=1 // pred_fallthru
      _
    %v21 = vld [vmem:[#allocation2] sm:$0x1]
    %v22 = vunpack.c.0.s8 %v21
    %v23 = vand.u32 %v22, 255
    %v24 = vlaneseq
    %v25 = vshrl.u32 %v24, 7
    %v26 = vlaneseq
    %v27 = vshrl.u32 %v26, 7
    %v28 = vsub.s32 0, %v27
    %v29 = vrot.slane %v23, %v28
    %vm30 = vcmp.eq.s32.totalorder %v25, %v29
    %v31 = vsel %vm30, 1, 0
    %v32 = vcvt.s32.f32 %v31
    %vm33 = vcmp.eq.s32.totalorder %v23, 4
    %v34 = vsel %vm33, 1, 0
    %v35 = vlaneseq
    %v36 = vshrl.u32 %v35, 7
    %v37 = vsub.s32 0, %v36
    %v38 = vrot.slane %v34, %v37
    %vm39 = vcmp.eq.s32.totalorder %v38, 1
    %v40 = vsel %vm39, 0.25, %v32
    %41 = vst [vmem:[#allocation5] sm:$0xf] %v40
    // Predicated region
    $region10: #{tpu_custom_call.1} parent=1 // pred_check
      _
    $region11: #{tpu_custom_call.1} parent=1 // pred_check_branch
      %43 = sbr.rel (0) target = $region13
    $region12: #{tpu_custom_call.1} parent=1 // pred_region
      %s45 = ssub.s32 64, 64
      %46 = vsyncadd [#allocation4], %s45
      %s48 = sshll.u32 [#allocation5], 4
      %s49 = int_to_ptr.vmem [resolvable:$true] %s48
      %51 = dma.vmem_to_hbm [thread:$0]  %s49, 64, %s1, [#allocation4]
    $region13: #{tpu_custom_call.1} parent=1 // pred_fallthru
      _
    // Predicated region
    $region14: #{tpu_custom_call.1} parent=1 // pred_check
      _
    $region15: #{tpu_custom_call.1} parent=1 // pred_check_branch
      %53 = sbr.rel (0) target = $region17
    $region16: #{tpu_custom_call.1} parent=1 // pred_region
      %54 = dma.done [#allocation4], 64
    $region17: #{tpu_custom_call.1} parent=1 // pred_fallthru
      _
    %55 = vsyncpa [#allocation3], 1
    %56 = vsyncpa [#allocation4], 1

</llo_original>
